<compile_context>
chip_gen: v5e
topology: v5e:2x2
jax: 0.10.0
libtpu: 0.0.40
codegen_flags: <defaults>
</compile_context>

<pallas_src>
import math

import jax
import jax.numpy as jnp
from jax.experimental import pallas as pl
from jax.experimental.pallas import tpu as pltpu

_LANE = 128
_LEAKY_SLOPE = 0.01
_IN_EPS = 1e-5
# Bicubic (cubic convolution, A=-0.75) taps at fractional offset 0.5 -- the fixed
# separable 4-tap filter of torch.nn.Upsample(scale_factor=0.5, mode='bicubic').
_BICUBIC_W = (-0.09375, 0.59375, 0.59375, -0.09375)


def _round_up(x, m):
    return (x + m - 1) // m * m


# ----------------------------------------------------------------------------
# Generic fused conv kernel: VALID stride-1 conv as a single im2col matmul
# (bf16 operands, f32 accumulation) + bias, optionally fused
# InstanceNorm2d(affine=False) + LeakyReLU.  One grid step == one sample, so the
# per-sample/per-channel IN statistics live entirely inside the kernel.
# ----------------------------------------------------------------------------
def _make_conv_kernel(Ho, Wo, KH, KW, mode):
    def kernel(x_ref, w_ref, b_ref, o_ref):
        x = x_ref[0]                                    # (Hi, Wi, Cin), bf16
        if KH == 1 and KW == 1:
            patches = x                                 # wrapper already did im2col
        else:
            # in-kernel im2col: KH*KW unit-offset slices, lane-aligned concat
            # (Cin is a multiple of 128 on this path).
            cols = [x[kh:kh + Ho, kw:kw + Wo, :]
                    for kh in range(KH) for kw in range(KW)]
            patches = jnp.concatenate(cols, axis=-1)    # (Ho, Wo, KH*KW*Cin)
        # single MXU contraction over the fused K dim, f32 accumulation.
        acc = jnp.einsum("hwk,ko->hwo", patches, w_ref[...],
                         preferred_element_type=jnp.float32)   # (Ho, Wo, Cp) f32
        acc = acc + b_ref[...]                                  # (1, Cp) broadcast

        if mode == "in_lrelu":
            # InstanceNorm2d(affine=False): per-channel mean/var over spatial
            # dims of this sample (f32), then LeakyReLU(0.01).
            mean = jnp.mean(acc, axis=(0, 1), keepdims=True)
            cen = acc - mean
            var = jnp.mean(cen * cen, axis=(0, 1), keepdims=True)
            acc = cen * jax.lax.rsqrt(var + _IN_EPS)
            acc = jnp.where(acc >= 0.0, acc, _LEAKY_SLOPE * acc)

        o_ref[0] = acc.astype(o_ref.dtype)
    return kernel


def conv2d_fused(x_nhwc, w_hwio, bias, *, mode, out_dtype):
    """VALID stride-1 conv (+ fused epilogue).  Returns (B, Ho, Wo, Cout_pad128)."""
    B, Hi, Wi, Cin = x_nhwc.shape
    KH, KW, _, Cout = w_hwio.shape
    Ho, Wo = Hi - KH + 1, Wi - KW + 1
    K = KH * KW * Cin
    Cp = _round_up(Cout, _LANE)                         # lane-dense output store

    w2d = jnp.pad(w_hwio, ((0, 0), (0, 0), (0, 0), (0, Cp - Cout)))
    w2d = w2d.reshape(K, Cp).astype(jnp.bfloat16)       # (K, Cp), row order (kh,kw,cin)
    b2d = jnp.pad(bias.astype(jnp.float32).reshape(1, Cout),
                  ((0, 0), (0, Cp - Cout)))             # (1, Cp) f32
    x = x_nhwc.astype(jnp.bfloat16)

    kernel = _make_conv_kernel(Ho, Wo, KH, KW, mode)
    return pl.pallas_call(
        kernel,
        out_shape=jax.ShapeDtypeStruct((B, Ho, Wo, Cp), out_dtype),
        grid_spec=pltpu.PrefetchScalarGridSpec(
            num_scalar_prefetch=0,
            grid=(B,),
            in_specs=[
                pl.BlockSpec((1, Hi, Wi, Cin), lambda b: (b, 0, 0, 0)),
                pl.BlockSpec((K, Cp), lambda b: (0, 0)),
                pl.BlockSpec((1, Cp), lambda b: (0, 0)),
            ],
            out_specs=pl.BlockSpec((1, Ho, Wo, Cp), lambda b: (b, 0, 0, 0)),
        ),
        compiler_params=pltpu.CompilerParams(dimension_semantics=("parallel",)),
    )(x, w2d, b2d)


# ----------------------------------------------------------------------------
# mode='conv': stride-2 conv -> IN -> LeakyReLU -> stride-1 conv
# ----------------------------------------------------------------------------
def conv_mode_forward(x_nchw, params):
    w1, b1, w2, b2 = params                             # HWIO weights
    B, Cin, H, W = x_nchw.shape
    assert H % 2 == 0 and W % 2 == 0, "even spatial dims assumed"
    KH, KW, _, Cout = w1.shape
    Ho, Wo = H // 2, W // 2

    x = jnp.transpose(x_nchw, (0, 2, 3, 1))             # NHWC
    # --- conv1 (stride 2, replicate pad 1): im2col in the wrapper (XLA strided
    #     windows), so the Pallas kernel is one dense matmul with K = 9*Cin. ---
    xp = jnp.pad(x, ((0, 0), (1, 1), (1, 1), (0, 0)), mode="edge")
    cols = [xp[:, kh:kh + 2 * Ho:2, kw:kw + 2 * Wo:2, :]
            for kh in range(KH) for kw in range(KW)]
    patches = jnp.concatenate(cols, axis=-1)            # (B, Ho, Wo, 9*Cin)
    w1_flat = w1.reshape(1, 1, KH * KW * Cin, Cout)
    h = conv2d_fused(patches, w1_flat, b1, mode="in_lrelu",
                     out_dtype=jnp.bfloat16)            # (B, Ho, Wo, Cp) bf16
    Cp = h.shape[-1]

    # --- conv2 (stride 1, replicate pad 1): halo the bf16 activation; im2col
    #     happens in-kernel (Cin = Cp is lane-aligned). Padded channels are zero
    #     and carry zero weight rows, so no slicing between the two layers. ---
    hp = jnp.pad(h, ((0, 0), (1, 1), (1, 1), (0, 0)), mode="edge")
    w2p = jnp.pad(w2, ((0, 0), (0, 0), (0, Cp - Cout), (0, 0)))
    y = conv2d_fused(hp, w2p, b2, mode="none", out_dtype=jnp.float32)
    y = y[..., :Cout]
    return jnp.transpose(y, (0, 3, 1, 2))               # back to NCHW


# ----------------------------------------------------------------------------
# mode='pool': MaxPool2d(2)
# ----------------------------------------------------------------------------
def maxpool2_forward(x_nchw):
    B, C, H, W = x_nchw.shape
    assert H % 2 == 0 and W % 2 == 0, "even spatial dims assumed"
    Ho, Wo = H // 2, W // 2
    x = jnp.transpose(x_nchw, (0, 2, 3, 1))             # NHWC
    # stack the 4 window taps along the leading (row) axis -> static slices only.
    x = x.reshape(B, Ho, 2, Wo, 2, C).transpose(0, 2, 4, 1, 3, 5)
    x = x.reshape(B, 4 * Ho, Wo, C)

    def kernel(x_ref, o_ref):
        v = x_ref[0]                                    # (4*Ho, Wo, C)
        m = jnp.maximum(jnp.maximum(v[0:Ho], v[Ho:2 * Ho]),
                        jnp.maximum(v[2 * Ho:3 * Ho], v[3 * Ho:4 * Ho]))
        o_ref[0] = m

    out = pl.pallas_call(
        kernel,
        out_shape=jax.ShapeDtypeStruct((B, Ho, Wo, C), x_nchw.dtype),
        grid_spec=pltpu.PrefetchScalarGridSpec(
            num_scalar_prefetch=0,
            grid=(B,),
            in_specs=[pl.BlockSpec((1, 4 * Ho, Wo, C), lambda b: (b, 0, 0, 0))],
            out_specs=pl.BlockSpec((1, Ho, Wo, C), lambda b: (b, 0, 0, 0)),
        ),
        compiler_params=pltpu.CompilerParams(dimension_semantics=("parallel",)),
    )(x)
    return jnp.transpose(out, (0, 3, 1, 2))


# ----------------------------------------------------------------------------
# mode='interp': bicubic 0.5x downsample (fixed separable 4-tap filter,
# align_corners=False, indices clamped == edge padding by 1).
# ----------------------------------------------------------------------------
def bicubic_down2_forward(x_nchw):
    B, C, H, W = x_nchw.shape
    assert H % 2 == 0 and W % 2 == 0, "even spatial dims assumed"
    Ho, Wo = H // 2, W // 2
    Hs, Ws = Ho + 1, Wo + 1
    x = jnp.transpose(x_nchw, (0, 2, 3, 1))             # NHWC
    xp = jnp.pad(x, ((0, 0), (1, 1), (1, 1), (0, 0)), mode="edge")
    # space-to-depth: stack the 4 (row,col) parity phases along the row axis,
    # so the kernel only needs unit-offset static slices.
    phases = [xp[:, ph::2, pw::2, :] for ph in (0, 1) for pw in (0, 1)]
    xs = jnp.concatenate(phases, axis=1)                # (B, 4*Hs, Ws, C)

    def kernel(x_ref, o_ref):
        v = x_ref[0].astype(jnp.float32)                # (4*Hs, Ws, C)
        acc = jnp.zeros((Ho, Wo, C), jnp.float32)
        for th in range(4):
            ph, dh = th % 2, th // 2
            for tw in range(4):
                pw, dw = tw % 2, tw // 2
                blk = (ph * 2 + pw) * Hs
                coeff = _BICUBIC_W[th] * _BICUBIC_W[tw]
                acc = acc + coeff * v[blk + dh:blk + dh + Ho, dw:dw + Wo, :]
        o_ref[0] = acc.astype(o_ref.dtype)

    out = pl.pallas_call(
        kernel,
        out_shape=jax.ShapeDtypeStruct((B, Ho, Wo, C), x_nchw.dtype),
        grid_spec=pltpu.PrefetchScalarGridSpec(
            num_scalar_prefetch=0,
            grid=(B,),
            in_specs=[pl.BlockSpec((1, 4 * Hs, Ws, C), lambda b: (b, 0, 0, 0))],
            out_specs=pl.BlockSpec((1, Ho, Wo, C), lambda b: (b, 0, 0, 0)),
        ),
        compiler_params=pltpu.CompilerParams(dimension_semantics=("parallel",)),
    )(xs)
    return jnp.transpose(out, (0, 3, 1, 2))


def downsample_forward(x_nchw, mode="pool", params=None):
    """Mirrors downsample.forward for the given construction mode."""
    if mode == "pool":
        return maxpool2_forward(x_nchw)
    if mode == "conv":
        return conv_mode_forward(x_nchw, params)
    if mode == "interp":
        return bicubic_down2_forward(x_nchw)
    raise ValueError(mode)


# ----------------------------------------------------------------------------
# Pure-JAX references (for validation only).
# ----------------------------------------------------------------------------
def _maxpool_ref(x):
    B, C, H, W = x.shape
    return x.reshape(B, C, H // 2, 2, W // 2, 2).max(axis=(3, 5))


def _conv_ref(x_nchw, params):
    w1, b1, w2, b2 = params
    x = jnp.transpose(x_nchw, (0, 2, 3, 1))
    xp = jnp.pad(x, ((0, 0), (1, 1), (1, 1), (0, 0)), mode="edge")
    dn = jax.lax.conv_dimension_numbers(xp.shape, w1.shape, ("NHWC", "HWIO", "NHWC"))
    y = jax.lax.conv_general_dilated(xp, w1, (2, 2), "VALID", dimension_numbers=dn,
                                     precision=jax.lax.Precision.HIGHEST) + b1
    mean = y.mean(axis=(1, 2), keepdims=True)
    var = ((y - mean) ** 2).mean(axis=(1, 2), keepdims=True)
    y = (y - mean) * jax.lax.rsqrt(var + _IN_EPS)
    y = jnp.where(y >= 0, y, _LEAKY_SLOPE * y)
    yp = jnp.pad(y, ((0, 0), (1, 1), (1, 1), (0, 0)), mode="edge")
    dn2 = jax.lax.conv_dimension_numbers(yp.shape, w2.shape, ("NHWC", "HWIO", "NHWC"))
    y = jax.lax.conv_general_dilated(yp, w2, (1, 1), "VALID", dimension_numbers=dn2,
                                     precision=jax.lax.Precision.HIGHEST) + b2
    return jnp.transpose(y, (0, 3, 1, 2))


def _bicubic_ref(x_nchw):
    B, C, H, W = x_nchw.shape
    wt = jnp.array(_BICUBIC_W, jnp.float32)
    ih = jnp.clip(2 * jnp.arange(H // 2)[:, None] - 1 + jnp.arange(4)[None, :], 0, H - 1)
    iw = jnp.clip(2 * jnp.arange(W // 2)[:, None] - 1 + jnp.arange(4)[None, :], 0, W - 1)
    xh = x_nchw[:, :, ih, :]                            # (B, C, Ho, 4, W)
    xh = jnp.einsum("bchtw,t->bchw", xh, wt)
    xw = xh[:, :, :, iw]                                # (B, C, Ho, Wo, 4)
    return jnp.einsum("bchwt,t->bchw", xw, wt)


if __name__ == "__main__":
    key = jax.random.PRNGKey(0)
    k_x, k_w1, k_b1, k_w2, k_b2 = jax.random.split(key, 5)

    B, C, H, W = 2, 4, 16, 16
    Cout = 8
    x = jax.random.normal(k_x, (B, C, H, W), jnp.float32)

    # ---- mode='pool' (module default) ----
    y_pool = jax.jit(lambda v: downsample_forward(v, mode="pool"))(x)
    jax.block_until_ready(y_pool)
    assert y_pool.shape == (B, C, H // 2, W // 2), y_pool.shape
    assert bool(jnp.allclose(y_pool, _maxpool_ref(x))), "maxpool mismatch"

    # ---- mode='conv' ----
    bnd1 = 1.0 / math.sqrt(C * 9)
    bnd2 = 1.0 / math.sqrt(Cout * 9)
    w1 = jax.random.uniform(k_w1, (3, 3, C, Cout), jnp.float32, -bnd1, bnd1)
    b1 = jax.random.uniform(k_b1, (Cout,), jnp.float32, -bnd1, bnd1)
    w2 = jax.random.uniform(k_w2, (3, 3, Cout, Cout), jnp.float32, -bnd2, bnd2)
    b2 = jax.random.uniform(k_b2, (Cout,), jnp.float32, -bnd2, bnd2)
    params = (w1, b1, w2, b2)

    y_conv = jax.jit(lambda v: downsample_forward(v, mode="conv", params=params))(x)
    jax.block_until_ready(y_conv)
    assert y_conv.shape == (B, Cout, H // 2, W // 2), y_conv.shape
    assert bool(jnp.all(jnp.isfinite(y_conv)))
    err = float(jnp.max(jnp.abs(y_conv - _conv_ref(x, params))))
    assert err < 0.15, f"conv path max abs err {err}"   # bf16-matmul tolerance

    # ---- mode='interp' ----
    y_interp = jax.jit(lambda v: downsample_forward(v, mode="interp"))(x)
    jax.block_until_ready(y_interp)
    assert y_interp.shape == (B, C, H // 2, W // 2), y_interp.shape
    assert bool(jnp.allclose(y_interp, _bicubic_ref(x), atol=1e-4, rtol=1e-4)), \
        "bicubic mismatch"

    print("KERNEL_OK")
</pallas_src>

<mosaic_0001>
module attributes {stable_mosaic.version = 11 : i64} {
  func.func @kernel(%arg0: i32, %arg1: memref<1x32x8x4xf32, #tpu.memory_space<vmem>>, %arg2: memref<1x8x8x4xf32, #tpu.memory_space<vmem>>) attributes {dimension_semantics = [#tpu.dimension_semantics<parallel>], iteration_bounds = array<i64: 2>, scalar_prefetch = 0 : i64, scratch_operands = 0 : i64, tpu.core_type = #tpu.core_type<tc>, window_params = [{transform_indices = @transform_0, window_bounds = array<i64: 1, 32, 8, 4>}, {transform_indices = @transform_1, window_bounds = array<i64: 1, 8, 8, 4>}]} {
    %c0 = arith.constant 0 : index
    %c0_0 = arith.constant 0 : index
    %c0_1 = arith.constant 0 : index
    %c0_2 = arith.constant 0 : index
    %0 = vector.load %arg1[%c0, %c0_0, %c0_1, %c0_2] : memref<1x32x8x4xf32, #tpu.memory_space<vmem>>, vector<1x32x8x4xf32>
    %1 = vector.shape_cast %0 : vector<1x32x8x4xf32> to vector<32x8x4xf32>
    %2 = vector.extract_strided_slice %1 {offsets = [0, 0, 0], sizes = [8, 8, 4], strides = [1, 1, 1]} : vector<32x8x4xf32> to vector<8x8x4xf32>
    %3 = vector.extract_strided_slice %1 {offsets = [8, 0, 0], sizes = [8, 8, 4], strides = [1, 1, 1]} : vector<32x8x4xf32> to vector<8x8x4xf32>
    %4 = arith.maximumf %2, %3 : vector<8x8x4xf32>
    %5 = vector.extract_strided_slice %1 {offsets = [16, 0, 0], sizes = [8, 8, 4], strides = [1, 1, 1]} : vector<32x8x4xf32> to vector<8x8x4xf32>
    %6 = vector.extract_strided_slice %1 {offsets = [24, 0, 0], sizes = [8, 8, 4], strides = [1, 1, 1]} : vector<32x8x4xf32> to vector<8x8x4xf32>
    %7 = arith.maximumf %5, %6 : vector<8x8x4xf32>
    %8 = arith.maximumf %4, %7 : vector<8x8x4xf32>
    %c0_3 = arith.constant 0 : index
    %c0_4 = arith.constant 0 : index
    %c0_5 = arith.constant 0 : index
    %c0_6 = arith.constant 0 : index
    %9 = vector.load %arg2[%c0_3, %c0_4, %c0_5, %c0_6] : memref<1x8x8x4xf32, #tpu.memory_space<vmem>>, vector<1x8x8x4xf32>
    %10 = vector.shape_cast %9 : vector<1x8x8x4xf32> to vector<8x8x4xf32>
    %11 = vector.shape_cast %8 : vector<8x8x4xf32> to vector<1x8x8x4xf32>
    tpu.vector_store %arg2[%c0_3, %c0_4, %c0_5, %c0_6], %11 {strides = array<i32>} : memref<1x8x8x4xf32, #tpu.memory_space<vmem>>, vector<1x8x8x4xf32>,
    return
  }
  func.func @transform_0(%arg0: i32) -> (i32, i32, i32, i32) {
    %c0_i32 = arith.constant 0 : i32
    %c0_i32_0 = arith.constant 0 : i32
    %c0_i32_1 = arith.constant 0 : i32
    %c0_i32_2 = arith.constant 0 : i32
    return %arg0, %c0_i32, %c0_i32_0, %c0_i32_1 : i32, i32, i32, i32
  }
  func.func @transform_1(%arg0: i32) -> (i32, i32, i32, i32) {
    %c0_i32 = arith.constant 0 : i32
    %c0_i32_0 = arith.constant 0 : i32
    %c0_i32_1 = arith.constant 0 : i32
    %c0_i32_2 = arith.constant 0 : i32
    return %arg0, %c0_i32, %c0_i32_0, %c0_i32_1 : i32, i32, i32, i32
  }
}

</mosaic_0001>

<llo_original>
// kernel: _lambda_.1
$region0: #{_lambda_.1}
  #allocation0 [shape = 'u32[]', space=smem, size = 0x4, offset = 0x4, fixed_abs, tag = 'smem constant byte address 0x4 - core index']
  #allocation1 [shape = 'u32[72,128]{1,0:T(1,128)}', space=vmem, size = 0x9000, scoped, tag = 'internal scratch']
  %s0 = inlined_call_operand.vmem [shape: f32[2,32,8,4], index: 0, kind: input, shape index: {}]
  %s1 = inlined_call_operand.vmem [shape: f32[2,8,8,4], index: 1, kind: output, shape index: {}]
  %s2 = sld [smem:[#allocation0]]
  $region37: #{_lambda_.1} parent=0
    _
  %s4 = ssub.s32 1, %s2
  %s5 = scalar_select 0, %s4, %s2
  loop: start=0, step=1, limit=4
  $region2: #{_lambda_.1} parent=0 // loop_pre_header
    _
  $region3: #{_lambda_.1} parent=0 // loop_header
    %s7 = sphi 0, %s11
    %p8 = scmp.ge.s32.totalorder %s7, 4
    %s17 = sphi 0, %s19
    %s20 = sphi 0, %s17
    %s21 = sphi 0, %s20
    %s37 = sphi 0, %s21
    %s43 = sphi 0, %s45
    %s46 = sphi 0, %s43
    %s47 = sphi 0, %s46
    %s63 = sphi 0, %s47
  $region4: #{_lambda_.1} parent=0 // loop_header_branch
    %10 = sbr.rel (%p8) target = $region8
  $region5: #{_lambda_.1} parent=0 // loop_body
    %s12 = ssub.s32 %s7, 1
    %s13 = ssub.s32 %s7, 2
    %s14 = sadd.s32 %s7, 1
    %s15 = ssub.s32 %s7, %s14
    %p16 = scmp.eq.s32.totalorder %s15, 0
    %s18 = sadd.s32 %s17, 1
    %s19 = scalar_select %p16, %s17, %s18
    %p22 = pneg %p16
    %p23 = scmp.eq.s32.totalorder %s7, 1
    %p24 = por %p22, %p23
    %p25 = scmp.ne.s32.totalorder %s17, %s20
    %p26 = scmp.eq.s32.totalorder %s7, 0
    %p27 = por %p25, %p26
    %p28 = scmp.ne.s32.totalorder %s17, %s20
    %p29 = scmp.eq.s32.totalorder %s12, 1
    %p30 = por %p28, %p29
    %p31 = scmp.ne.s32.totalorder %s20, %s21
    %p32 = scmp.eq.s32.totalorder %s12, 0
    %p33 = por %p31, %p32
    %p34 = scmp.ne.s32.totalorder %s20, %s21
    %p35 = scmp.eq.s32.totalorder %s13, 1
    %p36 = por %p34, %p35
    %p38 = scmp.ne.s32.totalorder %s21, %s37
    %p39 = scmp.eq.s32.totalorder %s13, 0
    %p40 = por %p38, %p39
    %s41 = ssub.s32 %s7, %s14
    %p42 = scmp.eq.s32.totalorder %s41, 0
    %s44 = sadd.s32 %s43, 1
    %s45 = scalar_select %p42, %s43, %s44
    %p48 = pneg %p42
    %p49 = scmp.eq.s32.totalorder %s7, 1
    %p50 = por %p48, %p49
    %p51 = scmp.ne.s32.totalorder %s43, %s46
    %p52 = scmp.eq.s32.totalorder %s7, 0
    %p53 = por %p51, %p52
    %p54 = scmp.ne.s32.totalorder %s43, %s46
    %p55 = scmp.eq.s32.totalorder %s12, 1
    %p56 = por %p54, %p55
    %p57 = scmp.ne.s32.totalorder %s46, %s47
    %p58 = scmp.eq.s32.totalorder %s12, 0
    %p59 = por %p57, %p58
    %p60 = scmp.ne.s32.totalorder %s46, %s47
    %p61 = scmp.eq.s32.totalorder %s13, 1
    %p62 = por %p60, %p61
    %p64 = scmp.ne.s32.totalorder %s47, %s63
    %p65 = scmp.eq.s32.totalorder %s13, 0
    %p66 = por %p64, %p65
    %p67 = scmp.le.s32.totalorder 1, %s7
    %p68 = scmp.lt.s32.totalorder %s7, 3
    %p69 = pnand %p67, %p68
    %p70 = pneg %p69
    // Predicated region
    $region9: #{_lambda_.1} parent=5 // pred_check
      _
    $region10: #{_lambda_.1} parent=5 // pred_check_branch
      %72 = sbr.rel (%p69) target = $region12
    $region11: #{_lambda_.1} parent=5 // pred_region
      %s73 = ssub.s32 %s7, 1
    $region12: #{_lambda_.1} parent=5 // pred_fallthru
      _
    %p74 = scmp.lt.s32.totalorder %s7, 2
    // Predicated region
    $region13: #{_lambda_.1} parent=5 // pred_check
      %p75 = pneg %p74
    $region14: #{_lambda_.1} parent=5 // pred_check_branch
      %77 = sbr.rel (%p75) target = $region16
    $region15: #{_lambda_.1} parent=5 // pred_region
      // Predicated region
      $region17: #{_lambda_.1} parent=15 // pred_check
        %p78 = pneg %p27
      $region18: #{_lambda_.1} parent=15 // pred_check_branch
        %80 = sbr.rel (%p78) target = $region20
      $region19: #{_lambda_.1} parent=15 // pred_region
        %p81 = scmp.lt.s32.totalorder %s7, 1
        %s82 = scalar_select %p81, %s7, 1
        %s83 = smul.addr %s82, 32
        %s84 = smul.addr %s83, 8
        %s85 = scalar_lea.vmem %s0, %s84
      $region20: #{_lambda_.1} parent=15 // pred_fallthru
        _
    $region16: #{_lambda_.1} parent=5 // pred_fallthru
      _
    %p86 = scmp.le.s32.totalorder 1, %s7
    %p87 = scmp.lt.s32.totalorder %s7, 3
    %p88 = pnand %p86, %p87
    %p89 = pneg %p88
    // Predicated region
    $region21: #{_lambda_.1} parent=5 // pred_check
      _
    $region22: #{_lambda_.1} parent=5 // pred_check_branch
      %91 = sbr.rel (%p88) target = $region24
    $region23: #{_lambda_.1} parent=5 // pred_region
      %s92 = ssub.s32 %s7, 1
      %p93 = scmp.lt.s32.totalorder %s12, 1
      %s94 = scalar_select %p93, %s12, 1
      %s95 = smul.addr %s94, 32
      %s96 = smul.addr %s95, 8
      %s97 = scalar_lea.vmem %s0, %s96
      %p98 = pneg %p33
      %p99 = pneg %p30
      %p100 = pneg %p59
      %p101 = pneg %p56
      %p102 = scmp.lt.s32.totalorder %s12, 1
      %s103 = scalar_select %p102, %s12, 1
      %s104 = smul.addr %s103, 8
      %s105 = smul.addr %s104, 8
      %s106 = scalar_lea.vmem %s1, %s105
      %p107 = scmp.lt.s32.totalorder %s12, 1
      %s108 = scalar_select %p107, %s12, 1
      %s109 = smul.addr %s108, 32
      %s110 = smul.addr %s109, 8
      %s111 = scalar_lea.vmem %s0, %s110
      %p112 = scmp.lt.s32.totalorder %s12, 1
      %s113 = scalar_select %p112, %s12, 1
      %s114 = smul.addr %s113, 8
      %s115 = smul.addr %s114, 8
      %s116 = scalar_lea.vmem %s1, %s115
      %v117 = vld [vmem:[%s111] sm:$0xff]
      %v118 = vld [vmem:[%s111 + $0x8] sm:$0xff]
      %v119 = vld [vmem:[%s111 + $0x10] sm:$0xff]
      %v120 = vld [vmem:[%s111 + $0x18] sm:$0xff]
      %v121 = vld [vmem:[%s111 + $0x20] sm:$0xff]
      %v122 = vld [vmem:[%s111 + $0x28] sm:$0xff]
      %v123 = vld [vmem:[%s111 + $0x30] sm:$0xff]
      %v124 = vld [vmem:[%s111 + $0x38] sm:$0xff]
      %v125 = vld [vmem:[%s111 + $0x40] sm:$0xff]
      %v126 = vld [vmem:[%s111 + $0x48] sm:$0xff]
      %v127 = vld [vmem:[%s111 + $0x50] sm:$0xff]
      %v128 = vld [vmem:[%s111 + $0x58] sm:$0xff]
      %v129 = vld [vmem:[%s111 + $0x60] sm:$0xff]
      %v130 = vld [vmem:[%s111 + $0x68] sm:$0xff]
      %v131 = vld [vmem:[%s111 + $0x70] sm:$0xff]
      %v132 = vld [vmem:[%s111 + $0x78] sm:$0xff]
      %v133 = vld [vmem:[%s111 + $0x80] sm:$0xff]
      %v134 = vld [vmem:[%s111 + $0x88] sm:$0xff]
      %v135 = vld [vmem:[%s111 + $0x90] sm:$0xff]
      %v136 = vld [vmem:[%s111 + $0x98] sm:$0xff]
      %v137 = vld [vmem:[%s111 + $0xa0] sm:$0xff]
      %v138 = vld [vmem:[%s111 + $0xa8] sm:$0xff]
      %v139 = vld [vmem:[%s111 + $0xb0] sm:$0xff]
      %v140 = vld [vmem:[%s111 + $0xb8] sm:$0xff]
      %v141 = vld [vmem:[%s111 + $0xc0] sm:$0xff]
      %v142 = vld [vmem:[%s111 + $0xc8] sm:$0xff]
      %v143 = vld [vmem:[%s111 + $0xd0] sm:$0xff]
      %v144 = vld [vmem:[%s111 + $0xd8] sm:$0xff]
      %v145 = vld [vmem:[%s111 + $0xe0] sm:$0xff]
      %v146 = vld [vmem:[%s111 + $0xe8] sm:$0xff]
      %v147 = vld [vmem:[%s111 + $0xf0] sm:$0xff]
      %v148 = vld [vmem:[%s111 + $0xf8] sm:$0xff]
      %v149 = vmax.f32 %v117, %v125
      %v150 = vmax.f32 %v118, %v126
      %v151 = vmax.f32 %v119, %v127
      %v152 = vmax.f32 %v120, %v128
      %v153 = vmax.f32 %v121, %v129
      %v154 = vmax.f32 %v122, %v130
      %v155 = vmax.f32 %v123, %v131
      %v156 = vmax.f32 %v124, %v132
      %v157 = vmax.f32 %v133, %v141
      %v158 = vmax.f32 %v134, %v142
      %v159 = vmax.f32 %v135, %v143
      %v160 = vmax.f32 %v136, %v144
      %v161 = vmax.f32 %v137, %v145
      %v162 = vmax.f32 %v138, %v146
      %v163 = vmax.f32 %v139, %v147
      %v164 = vmax.f32 %v140, %v148
      %v165 = vmax.f32 %v149, %v157
      %v166 = vmax.f32 %v150, %v158
      %v167 = vmax.f32 %v151, %v159
      %v168 = vmax.f32 %v152, %v160
      %v169 = vmax.f32 %v153, %v161
      %v170 = vmax.f32 %v154, %v162
      %v171 = vmax.f32 %v155, %v163
      %v172 = vmax.f32 %v156, %v164
      %vm173 = vcmask 31744
      %174 = vst.msk [vmem:[%s116] sm:$0xff] %vm173, %v165
      %175 = vst.msk [vmem:[%s116 + $0x8] sm:$0xff] %vm173, %v166
      %176 = vst.msk [vmem:[%s116 + $0x10] sm:$0xff] %vm173, %v167
      %177 = vst.msk [vmem:[%s116 + $0x18] sm:$0xff] %vm173, %v168
      %178 = vst.msk [vmem:[%s116 + $0x20] sm:$0xff] %vm173, %v169
      %179 = vst.msk [vmem:[%s116 + $0x28] sm:$0xff] %vm173, %v170
      %180 = vst.msk [vmem:[%s116 + $0x30] sm:$0xff] %vm173, %v171
      %181 = vst.msk [vmem:[%s116 + $0x38] sm:$0xff] %vm173, %v172
      %p182 = scmp.lt.s32.totalorder %s12, 1
      %s183 = scalar_select %p182, %s12, 1
      %s184 = smul.addr %s183, 8
      %s185 = smul.addr %s184, 8
      %s186 = scalar_lea.vmem %s1, %s185
      // Predicated region
      $region25: #{_lambda_.1} parent=23 // pred_check
        %p187 = pneg %p56
      $region26: #{_lambda_.1} parent=23 // pred_check_branch
        %189 = sbr.rel (%p187) target = $region28
      $region27: #{_lambda_.1} parent=23 // pred_region
        _
      $region28: #{_lambda_.1} parent=23 // pred_fallthru
        _
    $region24: #{_lambda_.1} parent=5 // pred_fallthru
      _
    %p190 = scmp.le.s32.totalorder 2, %s7
    // Predicated region
    $region29: #{_lambda_.1} parent=5 // pred_check
      %p191 = pneg %p190
    $region30: #{_lambda_.1} parent=5 // pred_check_branch
      %193 = sbr.rel (%p191) target = $region32
    $region31: #{_lambda_.1} parent=5 // pred_region
      %s194 = ssub.s32 %s7, 2
      // Predicated region
      $region33: #{_lambda_.1} parent=31 // pred_check
        %p195 = pneg %p62
      $region34: #{_lambda_.1} parent=31 // pred_check_branch
        %197 = sbr.rel (%p195) target = $region36
      $region35: #{_lambda_.1} parent=31 // pred_region
        %p198 = scmp.lt.s32.totalorder %s13, 1
        %s199 = scalar_select %p198, %s13, 1
        %s200 = smul.addr %s199, 8
        %s201 = smul.addr %s200, 8
        %s202 = scalar_lea.vmem %s1, %s201
      $region36: #{_lambda_.1} parent=31 // pred_fallthru
        _
    $region32: #{_lambda_.1} parent=5 // pred_fallthru
      _
  $region6: #{_lambda_.1} parent=0 // loop_footer
    %s11 = sadd.s32 1, %s7
  $region7: #{_lambda_.1} parent=0 // loop_footer_branch
    %6 = sbr.rel target = $region3
  $region8: #{_lambda_.1} parent=0 // loop_exit
    _

</llo_original>
